<compile_context>
chip_gen: v7x
topology: tpu7x:2x2x1
jax: 0.10.0
libtpu: 0.0.40
codegen_flags: <defaults>
</compile_context>

<pallas_src>
import functools
import math

import jax
import jax.numpy as jnp
import numpy as np
from jax.experimental import pallas as pl
from jax.experimental.pallas import tpu as pltpu

# ---------------- configuration (small, consistent with the module) ----------
IN_FEATURES = 64
MLP_RATIO = 4.0
HIDDEN = int(IN_FEATURES * MLP_RATIO)          # 256
OUT_FEATURES = IN_FEATURES
B, N = 2, 64                                   # tokens: (B, N, C)

_SQRT_2_OVER_PI = 0.7978845608028654
_GELU_C = 0.044715


# ---------------- in-kernel math helpers -------------------------------------
def _gelu_tanh(h):
    # tanh-approx GELU (== jax.nn.gelu(approximate=True)); ~1e-3 abs error vs
    # exact erf GELU, well inside test tolerance.  One EUP op (tanh) + a few
    # VALU ops, vs ~25 VALU ops for the erf polynomial it replaces.
    dt = h.dtype
    c0 = jnp.asarray(_SQRT_2_OVER_PI, dt)
    c1 = jnp.asarray(_GELU_C, dt)
    half = jnp.asarray(0.5, dt)
    one = jnp.asarray(1.0, dt)
    return half * h * (one + jnp.tanh(c0 * (h + c1 * h * h * h)))


# ---------------- fused MLP kernel: fc1 -> GELU -> fc2 ------------------------
def _mlp_kernel(x_ref, w1_ref, b1_ref, w2_ref, b2_ref, o_ref, *, ew_dtype):
    # x_ref: (TM, C) f32 row tile; w1/w2 pre-cast bf16; biases f32.
    # MXU accumulates in f32; elementwise math runs in `ew_dtype`
    # (bf16 on v6e/v7x, f32 on v5e).
    x = x_ref[...].astype(jnp.bfloat16)

    h = jnp.dot(x, w1_ref[...], preferred_element_type=jnp.float32)   # (TM, HIDDEN) f32
    h = h.astype(ew_dtype) + b1_ref[...].astype(ew_dtype)
    h = _gelu_tanh(h)

    y = jnp.dot(h.astype(jnp.bfloat16), w2_ref[...],
                preferred_element_type=jnp.float32)                   # (TM, OUT) f32
    y = y + b2_ref[...]
    o_ref[...] = y.astype(o_ref.dtype)


# ---------------- wrapper helpers ---------------------------------------------
def _elementwise_dtype():
    # bf16 VPU/EUP exist on v6e/v7x only; keep f32 elementwise on older chips.
    try:
        kind = jax.devices()[0].device_kind.lower()
    except Exception:
        return jnp.float32
    return jnp.bfloat16 if ("v6" in kind or "v7" in kind) else jnp.float32


def _pick_row_tile(m):
    # Single grid step for small inputs (the grid is a serial loop on
    # single-TC chips; one big MXU slab beats several small ones).  Only tile
    # once the row count is large enough that VMEM residency would matter:
    # keep 2 * (tm x HIDDEN f32) + bf16 weights well under scoped VMEM.
    if m <= 1024:
        return m
    for tm in (1024, 512, 256, 128, 64, 32, 16, 8):
        if m % tm == 0:
            return tm
    return m


def _mlp_forward_impl(x, params):
    *lead, c = x.shape
    m = int(np.prod(lead))
    xs = x.reshape(m, c)

    # Weights should already be cached as bf16 by the caller; the fallback cast
    # below is a no-op in that case (and gets hoisted by jit otherwise).
    w1 = params["w1"]
    w2 = params["w2"]
    if w1.dtype != jnp.bfloat16:
        w1 = w1.astype(jnp.bfloat16)
    if w2.dtype != jnp.bfloat16:
        w2 = w2.astype(jnp.bfloat16)
    b1 = params["b1"].astype(jnp.float32)
    b2 = params["b2"].astype(jnp.float32)

    hidden = w1.shape[1]
    out_c = w2.shape[1]
    tm = _pick_row_tile(m)
    kernel = functools.partial(_mlp_kernel, ew_dtype=_elementwise_dtype())

    y = pl.pallas_call(
        kernel,
        out_shape=jax.ShapeDtypeStruct((m, out_c), x.dtype),
        grid_spec=pltpu.PrefetchScalarGridSpec(
            num_scalar_prefetch=0,
            grid=(m // tm,),                       # == (1,) at this size
            in_specs=[
                pl.BlockSpec((tm, c), lambda i: (i, 0)),
                pl.BlockSpec((c, hidden), lambda i: (0, 0)),
                pl.BlockSpec((1, hidden), lambda i: (0, 0)),
                pl.BlockSpec((hidden, out_c), lambda i: (0, 0)),
                pl.BlockSpec((1, out_c), lambda i: (0, 0)),
            ],
            out_specs=pl.BlockSpec((tm, out_c), lambda i: (i, 0)),
        ),
        compiler_params=pltpu.CompilerParams(
            dimension_semantics=("arbitrary",)),
    )(xs, w1, b1, w2, b2)

    return y.reshape(*lead, out_c)


mlp_forward = jax.jit(_mlp_forward_impl)


# ---------------- pure-JAX reference (for verification) -----------------------
def reference(x, p):
    h = x @ p["w1"] + p["b1"]
    h = 0.5 * h * (1.0 + jax.scipy.special.erf(h / jnp.sqrt(2.0)))   # exact-erf GELU
    return h @ p["w2"] + p["b2"]                                     # dropout p=0 -> identity


# ---------------- main ---------------------------------------------------------
if __name__ == "__main__":
    key = jax.random.PRNGKey(0)
    ks = jax.random.split(key, 5)

    def rnd(k, shape, scale):
        return (scale * jax.random.normal(k, shape)).astype(jnp.float32)

    # (in, out) weight layout == PyTorch nn.Linear weight transposed.
    params_f32 = {
        "w1": rnd(ks[0], (IN_FEATURES, HIDDEN), 0.08),
        "b1": rnd(ks[1], (1, HIDDEN), 0.05),
        "w2": rnd(ks[2], (HIDDEN, OUT_FEATURES), 0.08),
        "b2": rnd(ks[3], (1, OUT_FEATURES), 0.05),
    }

    # Cache the bf16 weight casts ONCE (not per forward call).
    kernel_params = {
        "w1": params_f32["w1"].astype(jnp.bfloat16),
        "b1": params_f32["b1"],
        "w2": params_f32["w2"].astype(jnp.bfloat16),
        "b2": params_f32["b2"],
    }

    x = jax.random.normal(ks[4], (B, N, IN_FEATURES), dtype=jnp.float32)

    out = jax.block_until_ready(mlp_forward(x, kernel_params))
    ref = jax.block_until_ready(reference(x, params_f32))
    np.testing.assert_allclose(np.asarray(out), np.asarray(ref), rtol=2e-2, atol=2e-2)
    print("KERNEL_OK")
</pallas_src>

<mosaic_0001>
module attributes {stable_mosaic.version = 11 : i64} {
  func.func @_mlp_kernel(%arg0: i32, %arg1: memref<128x64xf32, #tpu.memory_space<vmem>>, %arg2: memref<64x256xbf16, #tpu.memory_space<vmem>>, %arg3: memref<1x256xf32, #tpu.memory_space<vmem>>, %arg4: memref<256x64xbf16, #tpu.memory_space<vmem>>, %arg5: memref<1x64xf32, #tpu.memory_space<vmem>>, %arg6: memref<128x64xf32, #tpu.memory_space<vmem>>) attributes {dimension_semantics = [#tpu.dimension_semantics<arbitrary>], iteration_bounds = array<i64: 1>, scalar_prefetch = 0 : i64, scratch_operands = 0 : i64, tpu.core_type = #tpu.core_type<tc>, window_params = [{transform_indices = @transform_0, window_bounds = array<i64: 128, 64>}, {pipeline_mode = #tpu.pipeline_mode<synchronous>, transform_indices = @transform_1, window_bounds = array<i64: 64, 256>}, {pipeline_mode = #tpu.pipeline_mode<synchronous>, transform_indices = @transform_2, window_bounds = array<i64: 1, 256>}, {pipeline_mode = #tpu.pipeline_mode<synchronous>, transform_indices = @transform_3, window_bounds = array<i64: 256, 64>}, {pipeline_mode = #tpu.pipeline_mode<synchronous>, transform_indices = @transform_4, window_bounds = array<i64: 1, 64>}, {transform_indices = @transform_5, window_bounds = array<i64: 128, 64>}]} {
    %c0 = arith.constant 0 : index
    %c0_0 = arith.constant 0 : index
    %0 = vector.load %arg1[%c0, %c0_0] : memref<128x64xf32, #tpu.memory_space<vmem>>, vector<128x64xf32>
    %1 = arith.truncf %0 : vector<128x64xf32> to vector<128x64xbf16>
    %c0_1 = arith.constant 0 : index
    %c0_2 = arith.constant 0 : index
    %2 = vector.load %arg2[%c0_1, %c0_2] : memref<64x256xbf16, #tpu.memory_space<vmem>>, vector<64x256xbf16>
    %cst = arith.constant dense<0.000000e+00> : vector<128x256xf32>
    %3 = tpu.matmul %1, %2, %cst {dimension_numbers = #tpu.dot_dimension_numbers<[1], [0], [0], [1], [0, 0, 1, 1], [], []>} : vector<128x64xbf16>, vector<64x256xbf16>, vector<128x256xf32> -> vector<128x256xf32>
    %c0_3 = arith.constant 0 : index
    %c0_4 = arith.constant 0 : index
    %4 = vector.load %arg3[%c0_3, %c0_4] : memref<1x256xf32, #tpu.memory_space<vmem>>, vector<1x256xf32>
    %5 = vector.broadcast %4 : vector<1x256xf32> to vector<128x256xf32>
    %6 = arith.addf %3, %5 : vector<128x256xf32>
    %cst_5 = arith.constant 5.000000e-01 : f32
    %7 = vector.broadcast %cst_5 : f32 to vector<128x256xf32>
    %8 = arith.mulf %7, %6 : vector<128x256xf32>
    %cst_6 = arith.constant 4.471500e-02 : f32
    %9 = vector.broadcast %cst_6 : f32 to vector<128x256xf32>
    %10 = arith.mulf %9, %6 : vector<128x256xf32>
    %11 = arith.mulf %10, %6 : vector<128x256xf32>
    %12 = arith.mulf %11, %6 : vector<128x256xf32>
    %13 = arith.addf %6, %12 : vector<128x256xf32>
    %cst_7 = arith.constant 0.797884583 : f32
    %14 = vector.broadcast %cst_7 : f32 to vector<128x256xf32>
    %15 = arith.mulf %14, %13 : vector<128x256xf32>
    %16 = math.tanh %15 : vector<128x256xf32>
    %cst_8 = arith.constant 1.000000e+00 : f32
    %17 = vector.broadcast %cst_8 : f32 to vector<128x256xf32>
    %18 = arith.addf %17, %16 : vector<128x256xf32>
    %19 = arith.mulf %8, %18 : vector<128x256xf32>
    %20 = arith.truncf %19 : vector<128x256xf32> to vector<128x256xbf16>
    %c0_9 = arith.constant 0 : index
    %c0_10 = arith.constant 0 : index
    %21 = vector.load %arg4[%c0_9, %c0_10] : memref<256x64xbf16, #tpu.memory_space<vmem>>, vector<256x64xbf16>
    %cst_11 = arith.constant dense<0.000000e+00> : vector<128x64xf32>
    %22 = tpu.matmul %20, %21, %cst_11 {dimension_numbers = #tpu.dot_dimension_numbers<[1], [0], [0], [1], [0, 0, 1, 1], [], []>} : vector<128x256xbf16>, vector<256x64xbf16>, vector<128x64xf32> -> vector<128x64xf32>
    %c0_12 = arith.constant 0 : index
    %c0_13 = arith.constant 0 : index
    %23 = vector.load %arg5[%c0_12, %c0_13] : memref<1x64xf32, #tpu.memory_space<vmem>>, vector<1x64xf32>
    %24 = vector.broadcast %23 : vector<1x64xf32> to vector<128x64xf32>
    %25 = arith.addf %22, %24 : vector<128x64xf32>
    %c0_14 = arith.constant 0 : index
    %c0_15 = arith.constant 0 : index
    %26 = vector.load %arg6[%c0_14, %c0_15] : memref<128x64xf32, #tpu.memory_space<vmem>>, vector<128x64xf32>
    tpu.vector_store %arg6[%c0_14, %c0_15], %25 {strides = array<i32>} : memref<128x64xf32, #tpu.memory_space<vmem>>, vector<128x64xf32>,
    return
  }
  func.func @transform_0(%arg0: i32) -> (i32, i32) {
    %c0_i32 = arith.constant 0 : i32
    %c0_i32_0 = arith.constant 0 : i32
    return %arg0, %c0_i32 : i32, i32
  }
  func.func @transform_1(%arg0: i32) -> (i32, i32) {
    %c0_i32 = arith.constant 0 : i32
    %c0_i32_0 = arith.constant 0 : i32
    %c0_i32_1 = arith.constant 0 : i32
    return %c0_i32, %c0_i32_0 : i32, i32
  }
  func.func @transform_2(%arg0: i32) -> (i32, i32) {
    %c0_i32 = arith.constant 0 : i32
    %c0_i32_0 = arith.constant 0 : i32
    %c0_i32_1 = arith.constant 0 : i32
    return %c0_i32, %c0_i32_0 : i32, i32
  }
  func.func @transform_3(%arg0: i32) -> (i32, i32) {
    %c0_i32 = arith.constant 0 : i32
    %c0_i32_0 = arith.constant 0 : i32
    %c0_i32_1 = arith.constant 0 : i32
    return %c0_i32, %c0_i32_0 : i32, i32
  }
  func.func @transform_4(%arg0: i32) -> (i32, i32) {
    %c0_i32 = arith.constant 0 : i32
    %c0_i32_0 = arith.constant 0 : i32
    %c0_i32_1 = arith.constant 0 : i32
    return %c0_i32, %c0_i32_0 : i32, i32
  }
  func.func @transform_5(%arg0: i32) -> (i32, i32) {
    %c0_i32 = arith.constant 0 : i32
    %c0_i32_0 = arith.constant 0 : i32
    return %arg0, %c0_i32 : i32, i32
  }
}

</mosaic_0001>

<llo_original>
// kernel: _mlp_forward_impl.1
$region0: #{_mlp_forward_impl.1}
  #allocation0 [shape = 'u32[]', space=smem, size = 0x4, offset = 0x4, fixed_abs, tag = 'smem constant byte address 0x4 - core index']
  #allocation1 [shape = 'u32[144,128]{1,0:T(1,128)}', space=vmem, size = 0x12000, scoped, tag = 'internal scratch']
  %s0 = inlined_call_operand.vmem [shape: f32[128,64], index: 0, kind: input, shape index: {}]
  %s1 = inlined_call_operand.vmem [shape: bf16[64,256], index: 1, kind: input, shape index: {}]
  %s2 = inlined_call_operand.vmem [shape: f32[1,256], index: 2, kind: input, shape index: {}]
  %s3 = inlined_call_operand.vmem [shape: bf16[256,64], index: 3, kind: input, shape index: {}]
  %s4 = inlined_call_operand.vmem [shape: f32[1,64], index: 4, kind: input, shape index: {}]
  %s5 = inlined_call_operand.hbm [shape: f32[128,64], index: 5, kind: output, shape index: {}]
  %s6 = sld [smem:[#allocation0]]
  $region30: #{_mlp_forward_impl.1} parent=0
    _
  %s8 = ssub.s32 1, %s6
  %s9 = scalar_select 0, %s8, %s6
  $region1: #{_mlp_forward_impl.1} parent=0
    #allocation2 [shape = 'u8[65536]{0}', space=vmem, size = 0x10000, scoped, tag = 'output window, operand 0, single buffered']
    #allocation3 [shape = 's32[1]{0}', space=sflag, size = 0x4, scoped, tag = 'scoped memory for _mlp_forward_impl.1']
    %10 = vsyncpa [#allocation3], 0
    // Predicated region
    $region2: #{_mlp_forward_impl.1} parent=1 // pred_check
      _
    $region3: #{_mlp_forward_impl.1} parent=1 // pred_check_branch
      %12 = sbr.rel (0) target = $region5
    $region4: #{_mlp_forward_impl.1} parent=1 // pred_region
      _
    $region5: #{_mlp_forward_impl.1} parent=1 // pred_fallthru
      _
    // Predicated region
    $region6: #{_mlp_forward_impl.1} parent=1 // pred_check
      _
    $region7: #{_mlp_forward_impl.1} parent=1 // pred_check_branch
      %14 = sbr.rel (0) target = $region9
    $region8: #{_mlp_forward_impl.1} parent=1 // pred_region
      _
    $region9: #{_mlp_forward_impl.1} parent=1 // pred_fallthru
      _
    // Predicated region
    $region10: #{_mlp_forward_impl.1} parent=1 // pred_check
      _
    $region11: #{_mlp_forward_impl.1} parent=1 // pred_check_branch
      %16 = sbr.rel (0) target = $region13
    $region12: #{_mlp_forward_impl.1} parent=1 // pred_region
      _
    $region13: #{_mlp_forward_impl.1} parent=1 // pred_fallthru
      _
    // Predicated region
    $region14: #{_mlp_forward_impl.1} parent=1 // pred_check
      _
    $region15: #{_mlp_forward_impl.1} parent=1 // pred_check_branch
      %18 = sbr.rel (0) target = $region17
    $region16: #{_mlp_forward_impl.1} parent=1 // pred_region
      _
    $region17: #{_mlp_forward_impl.1} parent=1 // pred_fallthru
      _
    // Predicated region
    $region18: #{_mlp_forward_impl.1} parent=1 // pred_check
      _
    $region19: #{_mlp_forward_impl.1} parent=1 // pred_check_branch
      %20 = sbr.rel (0) target = $region21
    $region20: #{_mlp_forward_impl.1} parent=1 // pred_region
      _
    $region21: #{_mlp_forward_impl.1} parent=1 // pred_fallthru
      _
    %v22 = vld [vmem:[%s0] sm:$0xff]
    %v23 = vld [vmem:[%s0 + $0x8] sm:$0xff]
    %v24 = vld [vmem:[%s0 + $0x10] sm:$0xff]
    %v25 = vld [vmem:[%s0 + $0x18] sm:$0xff]
    %v26 = vld [vmem:[%s0 + $0x20] sm:$0xff]
    %v27 = vld [vmem:[%s0 + $0x28] sm:$0xff]
    %v28 = vld [vmem:[%s0 + $0x30] sm:$0xff]
    %v29 = vld [vmem:[%s0 + $0x38] sm:$0xff]
    %v30 = vld [vmem:[%s0 + $0x40] sm:$0xff]
    %v31 = vld [vmem:[%s0 + $0x48] sm:$0xff]
    %v32 = vld [vmem:[%s0 + $0x50] sm:$0xff]
    %v33 = vld [vmem:[%s0 + $0x58] sm:$0xff]
    %v34 = vld [vmem:[%s0 + $0x60] sm:$0xff]
    %v35 = vld [vmem:[%s0 + $0x68] sm:$0xff]
    %v36 = vld [vmem:[%s0 + $0x70] sm:$0xff]
    %v37 = vld [vmem:[%s0 + $0x78] sm:$0xff]
    %v38 = vpack.c.bf16 %v23, %v22
    %v39 = vpack.c.bf16 %v25, %v24
    %v40 = vpack.c.bf16 %v27, %v26
    %v41 = vpack.c.bf16 %v29, %v28
    %v42 = vpack.c.bf16 %v31, %v30
    %v43 = vpack.c.bf16 %v33, %v32
    %v44 = vpack.c.bf16 %v35, %v34
    %v45 = vpack.c.bf16 %v37, %v36
    %v46 = vld [vmem:[%s1] sm:$0xff]
    %v47 = vld [vmem:[%s1 + $0x8] sm:$0xff]
    %v48 = vld [vmem:[%s1 + $0x10] sm:$0xff]
    %v49 = vld [vmem:[%s1 + $0x18] sm:$0xff]
    %v50 = vld [vmem:[%s1 + $0x20] sm:$0xff]
    %v51 = vld [vmem:[%s1 + $0x28] sm:$0xff]
    %v52 = vld [vmem:[%s1 + $0x30] sm:$0xff]
    %v53 = vld [vmem:[%s1 + $0x38] sm:$0xff]
    %v54 = vld [vmem:[%s2] sm:$0x3]
    %v56 = vlaneseq
    %v57 = vshrl.u32 %v56, 7
    %v58 = vsub.s32 0, %v57
    %v59 = vrot.slane %v54, %v58
    %v60 = vlaneseq
    %v61 = vshrl.u32 %v60, 7
    %v62 = vsub.s32 1, %v61
    %v63 = vrot.slane %v54, %v62
    %v74 = vunpack.c.l.b16 %v46
    %v75 = vunpack.c.h.b16 %v46
    %v76 = vunpack.c.l.b16 %v47
    %v77 = vunpack.c.h.b16 %v47
    %v78 = vunpack.c.l.b16 %v48
    %v79 = vunpack.c.h.b16 %v48
    %v80 = vunpack.c.l.b16 %v49
    %v81 = vunpack.c.h.b16 %v49
    %v82 = vunpack.c.l.b16 %v50
    %v83 = vunpack.c.h.b16 %v50
    %v84 = vunpack.c.l.b16 %v51
    %v85 = vunpack.c.h.b16 %v51
    %v86 = vunpack.c.l.b16 %v52
    %v87 = vunpack.c.h.b16 %v52
    %v88 = vunpack.c.l.b16 %v53
    %v89 = vunpack.c.h.b16 %v53
    %v90 = vpack.c.b16 %v76, %v74
    %v91 = vpack.c.b16 %v77, %v75
    %v92 = vpack.c.b16 %v80, %v78
    %v93 = vpack.c.b16 %v81, %v79
    %v94 = vpack.c.b16 %v84, %v82
    %v95 = vpack.c.b16 %v85, %v83
    %v96 = vpack.c.b16 %v88, %v86
    %v97 = vpack.c.b16 %v89, %v87
    %vm106 = vcmask 523264
    %v108 = vsel %vm106, %v38, 0
    %v111 = vsel %vm106, %v39, 0
    %v114 = vsel %vm106, %v40, 0
    %v117 = vsel %vm106, %v41, 0
    %v120 = vsel %vm106, %v42, 0
    %v123 = vsel %vm106, %v43, 0
    %v126 = vsel %vm106, %v44, 0
    %v129 = vsel %vm106, %v45, 0
    %131 = vmatprep.subr.bf16.mxu0 %v91
    %132 = vmatpush1.bf16.msra.mxu0 %v90
    %133 = vmatprep.subr.bf16.mxu0 %v93
    %134 = vmatpush1.bf16.msra.mxu0 %v92
    %135 = vmatprep.subr.bf16.mxu0 %v95
    %136 = vmatpush1.bf16.msra.mxu0 %v94
    %137 = vmatprep.subr.bf16.mxu0 %v97
    %138 = vmatpush1.bf16.msra.mxu0 %v96
    %139 = vmatprep.subr.bf16.mxu0 0
    %140 = vmatpush1.bf16.msra.mxu0 0
    %141 = vmatprep.subr.bf16.mxu0 0
    %142 = vmatpush1.bf16.msra.mxu0 0
    %143 = vmatprep.subr.bf16.mxu0 0
    %144 = vmatpush1.bf16.msra.mxu0 0
    %145 = vmatprep.subr.bf16.mxu0 0
    %146 = vmatpush1.bf16.msra.mxu0 0
    %147 = vmatprep.subr.bf16.mxu0 0
    %148 = vmatpush1.bf16.msra.mxu0 0
    %149 = vmatprep.subr.bf16.mxu0 0
    %150 = vmatpush1.bf16.msra.mxu0 0
    %151 = vmatprep.subr.bf16.mxu0 0
    %152 = vmatpush1.bf16.msra.mxu0 0
    %153 = vmatprep.subr.bf16.mxu0 0
    %154 = vmatpush1.bf16.msra.mxu0 0
    %155 = vmatprep.subr.bf16.mxu0 0
    %156 = vmatpush1.bf16.msra.mxu0 0
    %157 = vmatprep.subr.bf16.mxu0 0
    %158 = vmatpush1.bf16.msra.mxu0 0
    %159 = vmatprep.subr.bf16.mxu0 0
    %160 = vmatpush1.bf16.msra.mxu0 0
    %161 = vmatprep.subr.bf16.mxu0 0
    %162 = vmatpush1.bf16.msra.mxu0 0
    %163 = vmatprep.mubr.bf16.mxu0 0
    %164 = vmatmul.mubr.bf16.gmra.mrb[0].mxu0 %v108
    %v165 = vpop.f32.mrb[0].mxu0
    %v166 = vadd.f32 %v59, %v165
    %v167 = vpop.f32.mrb[0].mxu0
    %v168 = vadd.f32 %v63, %v167
    %v169 = vpop.f32.mrb[0].mxu0
    %v170 = vadd.f32 %v59, %v169
    %v171 = vpop.f32.mrb[0].mxu0
    %v172 = vadd.f32 %v63, %v171
    %173 = vmatprep.mubr.bf16.mxu0 0
    %174 = vmatmul.mubr.bf16.gmra.mrb[0].mxu0 %v111
    %v175 = vpop.f32.mrb[0].mxu0
    %v176 = vadd.f32 %v59, %v175
    %v177 = vpop.f32.mrb[0].mxu0
    %v178 = vadd.f32 %v63, %v177
    %v179 = vpop.f32.mrb[0].mxu0
    %v180 = vadd.f32 %v59, %v179
    %v181 = vpop.f32.mrb[0].mxu0
    %v182 = vadd.f32 %v63, %v181
    %183 = vmatprep.mubr.bf16.mxu0 0
    %184 = vmatmul.mubr.bf16.gmra.mrb[0].mxu0 %v114
    %v185 = vpop.f32.mrb[0].mxu0
    %v186 = vadd.f32 %v59, %v185
    %v187 = vpop.f32.mrb[0].mxu0
    %v188 = vadd.f32 %v63, %v187
    %v189 = vpop.f32.mrb[0].mxu0
    %v190 = vadd.f32 %v59, %v189
    %v191 = vpop.f32.mrb[0].mxu0
    %v192 = vadd.f32 %v63, %v191
    %193 = vmatprep.mubr.bf16.mxu0 0
    %194 = vmatmul.mubr.bf16.gmra.mrb[0].mxu0 %v117
    %v195 = vpop.f32.mrb[0].mxu0
    %v196 = vadd.f32 %v59, %v195
    %v197 = vpop.f32.mrb[0].mxu0
    %v198 = vadd.f32 %v63, %v197
    %v199 = vpop.f32.mrb[0].mxu0
    %v200 = vadd.f32 %v59, %v199
    %v201 = vpop.f32.mrb[0].mxu0
    %v202 = vadd.f32 %v63, %v201
    %203 = vmatprep.mubr.bf16.mxu0 0
    %204 = vmatmul.mubr.bf16.gmra.mrb[0].mxu0 %v120
    %v205 = vpop.f32.mrb[0].mxu0
    %v206 = vadd.f32 %v59, %v205
    %v207 = vpop.f32.mrb[0].mxu0
    %v208 = vadd.f32 %v63, %v207
    %v209 = vpop.f32.mrb[0].mxu0
    %v210 = vadd.f32 %v59, %v209
    %v211 = vpop.f32.mrb[0].mxu0
    %v212 = vadd.f32 %v63, %v211
    %213 = vmatprep.mubr.bf16.mxu0 0
    %214 = vmatmul.mubr.bf16.gmra.mrb[0].mxu0 %v123
    %v215 = vpop.f32.mrb[0].mxu0
    %v216 = vadd.f32 %v59, %v215
    %v217 = vpop.f32.mrb[0].mxu0
    %v218 = vadd.f32 %v63, %v217
    %v219 = vpop.f32.mrb[0].mxu0
    %v220 = vadd.f32 %v59, %v219
    %v221 = vpop.f32.mrb[0].mxu0
    %v222 = vadd.f32 %v63, %v221
    %223 = vmatprep.mubr.bf16.mxu0 0
    %224 = vmatmul.mubr.bf16.gmra.mrb[0].mxu0 %v126
    %v225 = vpop.f32.mrb[0].mxu0
    %v226 = vadd.f32 %v59, %v225
    %v227 = vpop.f32.mrb[0].mxu0
    %v228 = vadd.f32 %v63, %v227
    %v229 = vpop.f32.mrb[0].mxu0
    %v230 = vadd.f32 %v59, %v229
    %v231 = vpop.f32.mrb[0].mxu0
    %v232 = vadd.f32 %v63, %v231
    %233 = vmatprep.mubr.bf16.mxu0 0
    %234 = vmatmul.mubr.bf16.gmra.mrb[0].mxu0 %v129
    %v235 = vpop.f32.mrb[0].mxu0
    %v236 = vadd.f32 %v59, %v235
    %v237 = vpop.f32.mrb[0].mxu0
    %v238 = vadd.f32 %v63, %v237
    %v239 = vpop.f32.mrb[0].mxu0
    %v240 = vadd.f32 %v59, %v239
    %v241 = vpop.f32.mrb[0].mxu0
    %v242 = vadd.f32 %v63, %v241
    %243 = vdwg.mxu0
    %v244 = vmul.f32 %v166, 0.5
    %v245 = vmul.f32 %v168, 0.5
    %v246 = vmul.f32 %v170, 0.5
    %v247 = vmul.f32 %v172, 0.5
    %v248 = vmul.f32 %v176, 0.5
    %v249 = vmul.f32 %v178, 0.5
    %v250 = vmul.f32 %v180, 0.5
    %v251 = vmul.f32 %v182, 0.5
    %v252 = vmul.f32 %v186, 0.5
    %v253 = vmul.f32 %v188, 0.5
    %v254 = vmul.f32 %v190, 0.5
    %v255 = vmul.f32 %v192, 0.5
    %v256 = vmul.f32 %v196, 0.5
    %v257 = vmul.f32 %v198, 0.5
    %v258 = vmul.f32 %v200, 0.5
    %v259 = vmul.f32 %v202, 0.5
    %v260 = vmul.f32 %v206, 0.5
    %v261 = vmul.f32 %v208, 0.5
    %v262 = vmul.f32 %v210, 0.5
    %v263 = vmul.f32 %v212, 0.5
    %v264 = vmul.f32 %v216, 0.5
    %v265 = vmul.f32 %v218, 0.5
    %v266 = vmul.f32 %v220, 0.5
    %v267 = vmul.f32 %v222, 0.5
    %v268 = vmul.f32 %v226, 0.5
    %v269 = vmul.f32 %v228, 0.5
    %v270 = vmul.f32 %v230, 0.5
    %v271 = vmul.f32 %v232, 0.5
    %v272 = vmul.f32 %v236, 0.5
    %v273 = vmul.f32 %v238, 0.5
    %v274 = vmul.f32 %v240, 0.5
    %v275 = vmul.f32 %v242, 0.5
    %v276 = vmul.f32 %v166, 0.044715
    %v277 = vmul.f32 %v168, 0.044715
    %v278 = vmul.f32 %v170, 0.044715
    %v279 = vmul.f32 %v172, 0.044715
    %v280 = vmul.f32 %v176, 0.044715
    %v281 = vmul.f32 %v178, 0.044715
    %v282 = vmul.f32 %v180, 0.044715
    %v283 = vmul.f32 %v182, 0.044715
    %v284 = vmul.f32 %v186, 0.044715
    %v285 = vmul.f32 %v188, 0.044715
    %v286 = vmul.f32 %v190, 0.044715
    %v287 = vmul.f32 %v192, 0.044715
    %v288 = vmul.f32 %v196, 0.044715
    %v289 = vmul.f32 %v198, 0.044715
    %v290 = vmul.f32 %v200, 0.044715
    %v291 = vmul.f32 %v202, 0.044715
    %v292 = vmul.f32 %v206, 0.044715
    %v293 = vmul.f32 %v208, 0.044715
    %v294 = vmul.f32 %v210, 0.044715
    %v295 = vmul.f32 %v212, 0.044715
    %v296 = vmul.f32 %v216, 0.044715
    %v297 = vmul.f32 %v218, 0.044715
    %v298 = vmul.f32 %v220, 0.044715
    %v299 = vmul.f32 %v222, 0.044715
    %v300 = vmul.f32 %v226, 0.044715
    %v301 = vmul.f32 %v228, 0.044715
    %v302 = vmul.f32 %v230, 0.044715
    %v303 = vmul.f32 %v232, 0.044715
    %v304 = vmul.f32 %v236, 0.044715
    %v305 = vmul.f32 %v238, 0.044715
    %v306 = vmul.f32 %v240, 0.044715
    %v307 = vmul.f32 %v242, 0.044715
    %v308 = vmul.f32 %v276, %v166
    %v309 = vmul.f32 %v277, %v168
    %v310 = vmul.f32 %v278, %v170
    %v311 = vmul.f32 %v279, %v172
    %v312 = vmul.f32 %v280, %v176
    %v313 = vmul.f32 %v281, %v178
    %v314 = vmul.f32 %v282, %v180
    %v315 = vmul.f32 %v283, %v182
    %v316 = vmul.f32 %v284, %v186
    %v317 = vmul.f32 %v285, %v188
    %v318 = vmul.f32 %v286, %v190
    %v319 = vmul.f32 %v287, %v192
    %v320 = vmul.f32 %v288, %v196
    %v321 = vmul.f32 %v289, %v198
    %v322 = vmul.f32 %v290, %v200
    %v323 = vmul.f32 %v291, %v202
    %v324 = vmul.f32 %v292, %v206
    %v325 = vmul.f32 %v293, %v208
    %v326 = vmul.f32 %v294, %v210
    %v327 = vmul.f32 %v295, %v212
    %v328 = vmul.f32 %v296, %v216
    %v329 = vmul.f32 %v297, %v218
    %v330 = vmul.f32 %v298, %v220
    %v331 = vmul.f32 %v299, %v222
    %v332 = vmul.f32 %v300, %v226
    %v333 = vmul.f32 %v301, %v228
    %v334 = vmul.f32 %v302, %v230
    %v335 = vmul.f32 %v303, %v232
    %v336 = vmul.f32 %v304, %v236
    %v337 = vmul.f32 %v305, %v238
    %v338 = vmul.f32 %v306, %v240
    %v339 = vmul.f32 %v307, %v242
    %v340 = vmul.f32 %v308, %v166
    %v341 = vmul.f32 %v309, %v168
    %v342 = vmul.f32 %v310, %v170
    %v343 = vmul.f32 %v311, %v172
    %v344 = vmul.f32 %v312, %v176
    %v345 = vmul.f32 %v313, %v178
    %v346 = vmul.f32 %v314, %v180
    %v347 = vmul.f32 %v315, %v182
    %v348 = vmul.f32 %v316, %v186
    %v349 = vmul.f32 %v317, %v188
    %v350 = vmul.f32 %v318, %v190
    %v351 = vmul.f32 %v319, %v192
    %v352 = vmul.f32 %v320, %v196
    %v353 = vmul.f32 %v321, %v198
    %v354 = vmul.f32 %v322, %v200
    %v355 = vmul.f32 %v323, %v202
    %v356 = vmul.f32 %v324, %v206
    %v357 = vmul.f32 %v325, %v208
    %v358 = vmul.f32 %v326, %v210
    %v359 = vmul.f32 %v327, %v212
    %v360 = vmul.f32 %v328, %v216
    %v361 = vmul.f32 %v329, %v218
    %v362 = vmul.f32 %v330, %v220
    %v363 = vmul.f32 %v331, %v222
    %v364 = vmul.f32 %v332, %v226
    %v365 = vmul.f32 %v333, %v228
    %v366 = vmul.f32 %v334, %v230
    %v367 = vmul.f32 %v335, %v232
    %v368 = vmul.f32 %v336, %v236
    %v369 = vmul.f32 %v337, %v238
    %v370 = vmul.f32 %v338, %v240
    %v371 = vmul.f32 %v339, %v242
    %v372 = vadd.f32 %v166, %v340
    %v373 = vadd.f32 %v168, %v341
    %v374 = vadd.f32 %v170, %v342
    %v375 = vadd.f32 %v172, %v343
    %v376 = vadd.f32 %v176, %v344
    %v377 = vadd.f32 %v178, %v345
    %v378 = vadd.f32 %v180, %v346
    %v379 = vadd.f32 %v182, %v347
    %v380 = vadd.f32 %v186, %v348
    %v381 = vadd.f32 %v188, %v349
    %v382 = vadd.f32 %v190, %v350
    %v383 = vadd.f32 %v192, %v351
    %v384 = vadd.f32 %v196, %v352
    %v385 = vadd.f32 %v198, %v353
    %v386 = vadd.f32 %v200, %v354
    %v387 = vadd.f32 %v202, %v355
    %v388 = vadd.f32 %v206, %v356
    %v389 = vadd.f32 %v208, %v357
    %v390 = vadd.f32 %v210, %v358
    %v391 = vadd.f32 %v212, %v359
    %v392 = vadd.f32 %v216, %v360
    %v393 = vadd.f32 %v218, %v361
    %v394 = vadd.f32 %v220, %v362
    %v395 = vadd.f32 %v222, %v363
    %v396 = vadd.f32 %v226, %v364
    %v397 = vadd.f32 %v228, %v365
    %v398 = vadd.f32 %v230, %v366
    %v399 = vadd.f32 %v232, %v367
    %v400 = vadd.f32 %v236, %v368
    %v401 = vadd.f32 %v238, %v369
    %v402 = vadd.f32 %v240, %v370
    %v403 = vadd.f32 %v242, %v371
    %v404 = vmul.f32 %v372, 0.7978846
    %v405 = vmul.f32 %v373, 0.7978846
    %v406 = vmul.f32 %v374, 0.7978846
    %v407 = vmul.f32 %v375, 0.7978846
    %v408 = vmul.f32 %v376, 0.7978846
    %v409 = vmul.f32 %v377, 0.7978846
    %v410 = vmul.f32 %v378, 0.7978846
    %v411 = vmul.f32 %v379, 0.7978846
    %v412 = vmul.f32 %v380, 0.7978846
    %v413 = vmul.f32 %v381, 0.7978846
    %v414 = vmul.f32 %v382, 0.7978846
    %v415 = vmul.f32 %v383, 0.7978846
    %v416 = vmul.f32 %v384, 0.7978846
    %v417 = vmul.f32 %v385, 0.7978846
    %v418 = vmul.f32 %v386, 0.7978846
    %v419 = vmul.f32 %v387, 0.7978846
    %v420 = vmul.f32 %v388, 0.7978846
    %v421 = vmul.f32 %v389, 0.7978846
    %v422 = vmul.f32 %v390, 0.7978846
    %v423 = vmul.f32 %v391, 0.7978846
    %v424 = vmul.f32 %v392, 0.7978846
    %v425 = vmul.f32 %v393, 0.7978846
    %v426 = vmul.f32 %v394, 0.7978846
    %v427 = vmul.f32 %v395, 0.7978846
    %v428 = vmul.f32 %v396, 0.7978846
    %v429 = vmul.f32 %v397, 0.7978846
    %v430 = vmul.f32 %v398, 0.7978846
    %v431 = vmul.f32 %v399, 0.7978846
    %v432 = vmul.f32 %v400, 0.7978846
    %v433 = vmul.f32 %v401, 0.7978846
    %v434 = vmul.f32 %v402, 0.7978846
    %v435 = vmul.f32 %v403, 0.7978846
    %v436 = vtanh.pop %v404
    %v437 = vtanh.pop %v405
    %v438 = vtanh.pop %v406
    %v439 = vtanh.pop %v407
    %v440 = vtanh.pop %v408
    %v441 = vtanh.pop %v409
    %v442 = vtanh.pop %v410
    %v443 = vtanh.pop %v411
    %v444 = vtanh.pop %v412
    %v445 = vtanh.pop %v413
    %v446 = vtanh.pop %v414
    %v447 = vtanh.pop %v415
    %v448 = vtanh.pop %v416
    %v449 = vtanh.pop %v417
    %v450 = vtanh.pop %v418
    %v451 = vtanh.pop %v419
    %v452 = vtanh.pop %v420
    %v453 = vtanh.pop %v421
    %v454 = vtanh.pop %v422
    %v455 = vtanh.pop %v423
    %v456 = vtanh.pop %v424
    %v457 = vtanh.pop %v425
    %v458 = vtanh.pop %v426
    %v459 = vtanh.pop %v427
    %v460 = vtanh.pop %v428
    %v461 = vtanh.pop %v429
    %v462 = vtanh.pop %v430
    %v463 = vtanh.pop %v431
    %v464 = vtanh.pop %v432
    %v465 = vtanh.pop %v433
    %v466 = vtanh.pop %v434
    %v467 = vtanh.pop %v435
    %v468 = vadd.f32 %v436, 1.0
    %v469 = vadd.f32 %v437, 1.0
    %v470 = vadd.f32 %v438, 1.0
    %v471 = vadd.f32 %v439, 1.0
    %v472 = vadd.f32 %v440, 1.0
    %v473 = vadd.f32 %v441, 1.0
    %v474 = vadd.f32 %v442, 1.0
    %v475 = vadd.f32 %v443, 1.0
    %v476 = vadd.f32 %v444, 1.0
    %v477 = vadd.f32 %v445, 1.0
    %v478 = vadd.f32 %v446, 1.0
    %v479 = vadd.f32 %v447, 1.0
    %v480 = vadd.f32 %v448, 1.0
    %v481 = vadd.f32 %v449, 1.0
    %v482 = vadd.f32 %v450, 1.0
    %v483 = vadd.f32 %v451, 1.0
    %v484 = vadd.f32 %v452, 1.0
    %v485 = vadd.f32 %v453, 1.0
    %v486 = vadd.f32 %v454, 1.0
    %v487 = vadd.f32 %v455, 1.0
    %v488 = vadd.f32 %v456, 1.0
    %v489 = vadd.f32 %v457, 1.0
    %v490 = vadd.f32 %v458, 1.0
    %v491 = vadd.f32 %v459, 1.0
    %v492 = vadd.f32 %v460, 1.0
    %v493 = vadd.f32 %v461, 1.0
    %v494 = vadd.f32 %v462, 1.0
    %v495 = vadd.f32 %v463, 1.0
    %v496 = vadd.f32 %v464, 1.0
    %v497 = vadd.f32 %v465, 1.0
    %v498 = vadd.f32 %v466, 1.0
    %v499 = vadd.f32 %v467, 1.0
    %v500 = vmul.f32 %v244, %v468
    %v501 = vmul.f32 %v245, %v469
    %v502 = vmul.f32 %v246, %v470
    %v503 = vmul.f32 %v247, %v471
    %v504 = vmul.f32 %v248, %v472
    %v505 = vmul.f32 %v249, %v473
    %v506 = vmul.f32 %v250, %v474
    %v507 = vmul.f32 %v251, %v475
    %v508 = vmul.f32 %v252, %v476
    %v509 = vmul.f32 %v253, %v477
    %v510 = vmul.f32 %v254, %v478
    %v511 = vmul.f32 %v255, %v479
    %v512 = vmul.f32 %v256, %v480
    %v513 = vmul.f32 %v257, %v481
    %v514 = vmul.f32 %v258, %v482
    %v515 = vmul.f32 %v259, %v483
    %v516 = vmul.f32 %v260, %v484
    %v517 = vmul.f32 %v261, %v485
    %v518 = vmul.f32 %v262, %v486
    %v519 = vmul.f32 %v263, %v487
    %v520 = vmul.f32 %v264, %v488
    %v521 = vmul.f32 %v265, %v489
    %v522 = vmul.f32 %v266, %v490
    %v523 = vmul.f32 %v267, %v491
    %v524 = vmul.f32 %v268, %v492
    %v525 = vmul.f32 %v269, %v493
    %v526 = vmul.f32 %v270, %v494
    %v527 = vmul.f32 %v271, %v495
    %v528 = vmul.f32 %v272, %v496
    %v529 = vmul.f32 %v273, %v497
    %v530 = vmul.f32 %v274, %v498
    %v531 = vmul.f32 %v275, %v499
    %v532 = vpack.c.bf16 %v502, %v500
    %v533 = vpack.c.bf16 %v503, %v501
    %v534 = vpack.c.bf16 %v506, %v504
    %v535 = vpack.c.bf16 %v507, %v505
    %v536 = vpack.c.bf16 %v510, %v508
    %v537 = vpack.c.bf16 %v511, %v509
    %v538 = vpack.c.bf16 %v514, %v512
    %v539 = vpack.c.bf16 %v515, %v513
    %v540 = vpack.c.bf16 %v518, %v516
    %v541 = vpack.c.bf16 %v519, %v517
    %v542 = vpack.c.bf16 %v522, %v520
    %v543 = vpack.c.bf16 %v523, %v521
    %v544 = vpack.c.bf16 %v526, %v524
    %v545 = vpack.c.bf16 %v527, %v525
    %v546 = vpack.c.bf16 %v530, %v528
    %v547 = vpack.c.bf16 %v531, %v529
    %v548 = vld [vmem:[%s3] sm:$0xf]
    %v549 = vld [vmem:[%s3 + $0x4] sm:$0xf]
    %v550 = vld [vmem:[%s3 + $0x8] sm:$0xf]
    %v551 = vld [vmem:[%s3 + $0xc] sm:$0xf]
    %v552 = vld [vmem:[%s3 + $0x10] sm:$0xf]
    %v553 = vld [vmem:[%s3 + $0x14] sm:$0xf]
    %v554 = vld [vmem:[%s3 + $0x18] sm:$0xf]
    %v555 = vld [vmem:[%s3 + $0x1c] sm:$0xf]
    %v556 = vld [vmem:[%s3 + $0x20] sm:$0xf]
    %v557 = vld [vmem:[%s3 + $0x24] sm:$0xf]
    %v558 = vld [vmem:[%s3 + $0x28] sm:$0xf]
    %v559 = vld [vmem:[%s3 + $0x2c] sm:$0xf]
    %v560 = vld [vmem:[%s3 + $0x30] sm:$0xf]
    %v561 = vld [vmem:[%s3 + $0x34] sm:$0xf]
    %v562 = vld [vmem:[%s3 + $0x38] sm:$0xf]
    %v563 = vld [vmem:[%s3 + $0x3c] sm:$0xf]
    %v564 = vld [vmem:[%s3 + $0x40] sm:$0xf]
    %v565 = vld [vmem:[%s3 + $0x44] sm:$0xf]
    %v566 = vld [vmem:[%s3 + $0x48] sm:$0xf]
    %v567 = vld [vmem:[%s3 + $0x4c] sm:$0xf]
    %v568 = vld [vmem:[%s3 + $0x50] sm:$0xf]
    %v569 = vld [vmem:[%s3 + $0x54] sm:$0xf]
    %v570 = vld [vmem:[%s3 + $0x58] sm:$0xf]
    %v571 = vld [vmem:[%s3 + $0x5c] sm:$0xf]
    %v572 = vld [vmem:[%s3 + $0x60] sm:$0xf]
    %v573 = vld [vmem:[%s3 + $0x64] sm:$0xf]
    %v574 = vld [vmem:[%s3 + $0x68] sm:$0xf]
    %v575 = vld [vmem:[%s3 + $0x6c] sm:$0xf]
    %v576 = vld [vmem:[%s3 + $0x70] sm:$0xf]
    %v577 = vld [vmem:[%s3 + $0x74] sm:$0xf]
    %v578 = vld [vmem:[%s3 + $0x78] sm:$0xf]
    %v579 = vld [vmem:[%s3 + $0x7c] sm:$0xf]
    %v580 = vld [vmem:[%s4] sm:$0x1]
    %v582 = vlaneseq
    %v583 = vshrl.u32 %v582, 7
    %v584 = vsub.s32 0, %v583
    %v585 = vrot.slane %v580, %v584
    %v619 = vunpack.c.l.b16 %v548
    %v620 = vunpack.c.l.b16 %v549
    %v621 = vunpack.c.l.b16 %v550
    %v622 = vunpack.c.l.b16 %v551
    %v623 = vunpack.c.l.b16 %v552
    %v624 = vunpack.c.l.b16 %v553
    %v625 = vunpack.c.l.b16 %v554
    %v626 = vunpack.c.l.b16 %v555
    %v627 = vunpack.c.l.b16 %v556
    %v628 = vunpack.c.l.b16 %v557
    %v629 = vunpack.c.l.b16 %v558
    %v630 = vunpack.c.l.b16 %v559
    %v631 = vunpack.c.l.b16 %v560
    %v632 = vunpack.c.l.b16 %v561
    %v633 = vunpack.c.l.b16 %v562
    %v634 = vunpack.c.l.b16 %v563
    %v635 = vunpack.c.l.b16 %v564
    %v636 = vunpack.c.l.b16 %v565
    %v637 = vunpack.c.l.b16 %v566
    %v638 = vunpack.c.l.b16 %v567
    %v639 = vunpack.c.l.b16 %v568
    %v640 = vunpack.c.l.b16 %v569
    %v641 = vunpack.c.l.b16 %v570
    %v642 = vunpack.c.l.b16 %v571
    %v643 = vunpack.c.l.b16 %v572
    %v644 = vunpack.c.l.b16 %v573
    %v645 = vunpack.c.l.b16 %v574
    %v646 = vunpack.c.l.b16 %v575
    %v647 = vunpack.c.l.b16 %v576
    %v648 = vunpack.c.l.b16 %v577
    %v649 = vunpack.c.l.b16 %v578
    %v650 = vunpack.c.l.b16 %v579
    %v651 = vpack.c.b16 %v620, %v619
    %v652 = vpack.c.b16 %v622, %v621
    %v653 = vpack.c.b16 %v624, %v623
    %v654 = vpack.c.b16 %v626, %v625
    %v655 = vpack.c.b16 %v628, %v627
    %v656 = vpack.c.b16 %v630, %v629
    %v657 = vpack.c.b16 %v632, %v631
    %v658 = vpack.c.b16 %v634, %v633
    %v659 = vpack.c.b16 %v636, %v635
    %v660 = vpack.c.b16 %v638, %v637
    %v661 = vpack.c.b16 %v640, %v639
    %v662 = vpack.c.b16 %v642, %v641
    %v663 = vpack.c.b16 %v644, %v643
    %v664 = vpack.c.b16 %v646, %v645
    %v665 = vpack.c.b16 %v648, %v647
    %v666 = vpack.c.b16 %v650, %v649
    %683 = vmatprep.subr.bf16.mxu0 0
    %684 = vmatpush1.bf16.msra.mxu0 %v651
    %685 = vmatprep.subr.bf16.mxu0 0
    %686 = vmatpush1.bf16.msra.mxu0 %v652
    %687 = vmatprep.subr.bf16.mxu0 0
    %688 = vmatpush1.bf16.msra.mxu0 %v653
    %689 = vmatprep.subr.bf16.mxu0 0
    %690 = vmatpush1.bf16.msra.mxu0 %v654
    %691 = vmatprep.subr.bf16.mxu0 0
    %692 = vmatpush1.bf16.msra.mxu0 %v655
    %693 = vmatprep.subr.bf16.mxu0 0
    %694 = vmatpush1.bf16.msra.mxu0 %v656
    %695 = vmatprep.subr.bf16.mxu0 0
    %696 = vmatpush1.bf16.msra.mxu0 %v657
    %697 = vmatprep.subr.bf16.mxu0 0
    %698 = vmatpush1.bf16.msra.mxu0 %v658
    %699 = vmatprep.subr.bf16.mxu0 0
    %700 = vmatpush1.bf16.msra.mxu0 %v659
    %701 = vmatprep.subr.bf16.mxu0 0
    %702 = vmatpush1.bf16.msra.mxu0 %v660
    %703 = vmatprep.subr.bf16.mxu0 0
    %704 = vmatpush1.bf16.msra.mxu0 %v661
    %705 = vmatprep.subr.bf16.mxu0 0
    %706 = vmatpush1.bf16.msra.mxu0 %v662
    %707 = vmatprep.subr.bf16.mxu0 0
    %708 = vmatpush1.bf16.msra.mxu0 %v663
    %709 = vmatprep.subr.bf16.mxu0 0
    %710 = vmatpush1.bf16.msra.mxu0 %v664
    %711 = vmatprep.subr.bf16.mxu0 0
    %712 = vmatpush1.bf16.msra.mxu0 %v665
    %713 = vmatprep.subr.bf16.mxu0 0
    %714 = vmatpush1.bf16.msra.mxu0 %v666
    %715 = vmatprep.mubr.bf16.mxu0 %v533
    %716 = vmatmul.mubr.bf16.gmra.mrb[0].mxu0 %v532
    %v717 = vpop.f32.mrb[0].mxu0
    %v718 = vadd.f32 %v585, %v717
    %v719 = vpop.f32.mrb[0].mxu0
    %v720 = vpop.f32.mrb[0].mxu0
    %v721 = vadd.f32 %v585, %v720
    %v722 = vpop.f32.mrb[0].mxu0
    %723 = vmatprep.mubr.bf16.mxu0 %v535
    %724 = vmatmul.mubr.bf16.gmra.mrb[0].mxu0 %v534
    %v725 = vpop.f32.mrb[0].mxu0
    %v726 = vadd.f32 %v585, %v725
    %v727 = vpop.f32.mrb[0].mxu0
    %v728 = vpop.f32.mrb[0].mxu0
    %v729 = vadd.f32 %v585, %v728
    %v730 = vpop.f32.mrb[0].mxu0
    %731 = vmatprep.mubr.bf16.mxu0 %v537
    %732 = vmatmul.mubr.bf16.gmra.mrb[0].mxu0 %v536
    %v733 = vpop.f32.mrb[0].mxu0
    %v734 = vadd.f32 %v585, %v733
    %v735 = vpop.f32.mrb[0].mxu0
    %v736 = vpop.f32.mrb[0].mxu0
    %v737 = vadd.f32 %v585, %v736
    %v738 = vpop.f32.mrb[0].mxu0
    %739 = vmatprep.mubr.bf16.mxu0 %v539
    %740 = vmatmul.mubr.bf16.gmra.mrb[0].mxu0 %v538
    %v741 = vpop.f32.mrb[0].mxu0
    %v742 = vadd.f32 %v585, %v741
    %v743 = vpop.f32.mrb[0].mxu0
    %v744 = vpop.f32.mrb[0].mxu0
    %v745 = vadd.f32 %v585, %v744
    %v746 = vpop.f32.mrb[0].mxu0
    %747 = vmatprep.mubr.bf16.mxu0 %v541
    %748 = vmatmul.mubr.bf16.gmra.mrb[0].mxu0 %v540
    %v749 = vpop.f32.mrb[0].mxu0
    %v750 = vadd.f32 %v585, %v749
    %v751 = vpop.f32.mrb[0].mxu0
    %v752 = vpop.f32.mrb[0].mxu0
    %v753 = vadd.f32 %v585, %v752
    %v754 = vpop.f32.mrb[0].mxu0
    %755 = vmatprep.mubr.bf16.mxu0 %v543
    %756 = vmatmul.mubr.bf16.gmra.mrb[0].mxu0 %v542
    %v757 = vpop.f32.mrb[0].mxu0
    %v758 = vadd.f32 %v585, %v757
    %v759 = vpop.f32.mrb[0].mxu0
    %v760 = vpop.f32.mrb[0].mxu0
    %v761 = vadd.f32 %v585, %v760
    %v762 = vpop.f32.mrb[0].mxu0
    %763 = vmatprep.mubr.bf16.mxu0 %v545
    %764 = vmatmul.mubr.bf16.gmra.mrb[0].mxu0 %v544
    %v765 = vpop.f32.mrb[0].mxu0
    %v766 = vadd.f32 %v585, %v765
    %v767 = vpop.f32.mrb[0].mxu0
    %v768 = vpop.f32.mrb[0].mxu0
    %v769 = vadd.f32 %v585, %v768
    %v770 = vpop.f32.mrb[0].mxu0
    %771 = vmatprep.mubr.bf16.mxu0 %v547
    %772 = vmatmul.mubr.bf16.gmra.mrb[0].mxu0 %v546
    %v773 = vpop.f32.mrb[0].mxu0
    %v774 = vadd.f32 %v585, %v773
    %v775 = vpop.f32.mrb[0].mxu0
    %v776 = vpop.f32.mrb[0].mxu0
    %v777 = vadd.f32 %v585, %v776
    %v778 = vpop.f32.mrb[0].mxu0
    %779 = vdwg.mxu0
    %780 = vst.msk [vmem:[#allocation2] sm:$0xff] %vm106, %v718
    %781 = vst.msk [vmem:[#allocation2 + $0x8] sm:$0xff] %vm106, %v721
    %782 = vst.msk [vmem:[#allocation2 + $0x10] sm:$0xff] %vm106, %v726
    %783 = vst.msk [vmem:[#allocation2 + $0x18] sm:$0xff] %vm106, %v729
    %784 = vst.msk [vmem:[#allocation2 + $0x20] sm:$0xff] %vm106, %v734
    %785 = vst.msk [vmem:[#allocation2 + $0x28] sm:$0xff] %vm106, %v737
    %786 = vst.msk [vmem:[#allocation2 + $0x30] sm:$0xff] %vm106, %v742
    %787 = vst.msk [vmem:[#allocation2 + $0x38] sm:$0xff] %vm106, %v745
    %788 = vst.msk [vmem:[#allocation2 + $0x40] sm:$0xff] %vm106, %v750
    %789 = vst.msk [vmem:[#allocation2 + $0x48] sm:$0xff] %vm106, %v753
    %790 = vst.msk [vmem:[#allocation2 + $0x50] sm:$0xff] %vm106, %v758
    %791 = vst.msk [vmem:[#allocation2 + $0x58] sm:$0xff] %vm106, %v761
    %792 = vst.msk [vmem:[#allocation2 + $0x60] sm:$0xff] %vm106, %v766
    %793 = vst.msk [vmem:[#allocation2 + $0x68] sm:$0xff] %vm106, %v769
    %794 = vst.msk [vmem:[#allocation2 + $0x70] sm:$0xff] %vm106, %v774
    %795 = vst.msk [vmem:[#allocation2 + $0x78] sm:$0xff] %vm106, %v777
    // Predicated region
    $region22: #{_mlp_forward_impl.1} parent=1 // pred_check
      _
    $region23: #{_mlp_forward_impl.1} parent=1 // pred_check_branch
      %797 = sbr.rel (0) target = $region25
    $region24: #{_mlp_forward_impl.1} parent=1 // pred_region
      %s799 = ssub.s32 2048, 2048
      %800 = vsyncadd [#allocation3], %s799
      %s801 = sshll.u32 [#allocation2], 4
      %s802 = int_to_ptr.vmem [resolvable:$true] %s801
      %807 = dma.vmem_to_hbm [thread:$0]  %s802, 2048, %s5, [#allocation3], 128, 128, 8
    $region25: #{_mlp_forward_impl.1} parent=1 // pred_fallthru
      _
    // Predicated region
    $region26: #{_mlp_forward_impl.1} parent=1 // pred_check
      _
    $region27: #{_mlp_forward_impl.1} parent=1 // pred_check_branch
      %809 = sbr.rel (0) target = $region29
    $region28: #{_mlp_forward_impl.1} parent=1 // pred_region
      %810 = dma.done [#allocation3], 2048
    $region29: #{_mlp_forward_impl.1} parent=1 // pred_fallthru
      _
    %811 = vsyncpa [#allocation3], 1

</llo_original>
